<compile_context>
chip_gen: v6e
topology: v6e:2x2x1
jax: 0.10.0
libtpu: 0.0.40
codegen_flags: <defaults>
</compile_context>

<pallas_src>
import functools

import numpy as np
import jax
import jax.numpy as jnp
from jax.experimental import pallas as pl
from jax.experimental.pallas import tpu as pltpu


# ---------------------------------------------------------------------------
# helpers
# ---------------------------------------------------------------------------

def _round_up(x, m):
    return (x + m - 1) // m * m


def _tile(dim, max_tile, align):
    """Return (tile, padded_dim).  If dim fits in one tile, use the full dim
    (no (8,128) constraint when block == full array dim); otherwise use an
    aligned max_tile and pad the array up to a multiple of it."""
    if dim <= max_tile:
        return dim, dim
    assert max_tile % align == 0
    return max_tile, _round_up(dim, max_tile)


# ---------------------------------------------------------------------------
# general tiled linear:  out = act(x @ w + b [+ y * y_w + y_b])
# ---------------------------------------------------------------------------

def _linear_kernel(x_ref, w_ref, b_ref, *rest, activation, fuse_y):
    if fuse_y:
        yv_ref, yw_ref, yb_ref, o_ref, acc_ref = rest
    else:
        o_ref, acc_ref = rest

    k = pl.program_id(2)

    @pl.when(k == 0)
    def _():
        acc_ref[...] = jnp.zeros_like(acc_ref)

    acc_ref[...] += jnp.dot(x_ref[...], w_ref[...],
                            preferred_element_type=jnp.float32)

    @pl.when(k == pl.num_programs(2) - 1)
    def _():
        y = acc_ref[...] + b_ref[...]
        if fuse_y:
            # fused y-encoder: Linear(1 -> E) is a rank-1 outer product (VPU)
            y = y + yv_ref[...] * yw_ref[...] + yb_ref[...]
        if activation == "relu":
            y = jnp.maximum(y, 0.0)
        elif activation == "gelu":
            # TODO(synk): PyTorch F.gelu uses exact erf; tanh approximation used.
            y = jax.nn.gelu(y, approximate=True)
        o_ref[...] = y.astype(o_ref.dtype)


def pallas_linear(x, w, b, activation="none", y=None, y_w=None, y_b=None,
                  out_dtype=jnp.float32, max_tm=512, max_tn=512, max_tk=512):
    M, K = x.shape
    Kw, N = w.shape
    assert K == Kw
    fuse_y = y is not None

    tm, Mp = _tile(M, max_tm, 8)
    tn, Np = _tile(N, max_tn, 128)
    tk, Kp = _tile(K, max_tk, 128)

    xp = x.astype(jnp.bfloat16)
    wp = w.astype(jnp.bfloat16)
    bp = b.reshape(1, N).astype(jnp.float32)
    # pad only when strictly needed (no extra HBM pass otherwise)
    if (Mp, Kp) != (M, K):
        xp = jnp.pad(xp, ((0, Mp - M), (0, Kp - K)))
    if (Kp, Np) != (K, N):
        wp = jnp.pad(wp, ((0, Kp - K), (0, Np - N)))
    if Np != N:
        bp = jnp.pad(bp, ((0, 0), (0, Np - N)))

    in_specs = [
        pl.BlockSpec((tm, tk), lambda i, j, k: (i, k)),
        pl.BlockSpec((tk, tn), lambda i, j, k: (k, j)),
        pl.BlockSpec((1, tn), lambda i, j, k: (0, j)),
    ]
    args = [xp, wp, bp]

    if fuse_y:
        yv = y.reshape(M, 1).astype(jnp.float32)
        if Mp != M:
            yv = jnp.pad(yv, ((0, Mp - M), (0, 0)))
        yw = y_w.reshape(1, N).astype(jnp.float32)
        yb = y_b.reshape(1, N).astype(jnp.float32)
        if Np != N:
            yw = jnp.pad(yw, ((0, 0), (0, Np - N)))
            yb = jnp.pad(yb, ((0, 0), (0, Np - N)))
        in_specs += [
            pl.BlockSpec((tm, 1), lambda i, j, k: (i, 0)),
            pl.BlockSpec((1, tn), lambda i, j, k: (0, j)),
            pl.BlockSpec((1, tn), lambda i, j, k: (0, j)),
        ]
        args += [yv, yw, yb]

    out = pl.pallas_call(
        functools.partial(_linear_kernel, activation=activation, fuse_y=fuse_y),
        out_shape=jax.ShapeDtypeStruct((Mp, Np), out_dtype),
        grid=(Mp // tm, Np // tn, Kp // tk),
        in_specs=in_specs,
        out_specs=pl.BlockSpec((tm, tn), lambda i, j, k: (i, j)),
        scratch_shapes=[pltpu.VMEM((tm, tn), jnp.float32)],
        compiler_params=pltpu.CompilerParams(
            dimension_semantics=("parallel", "parallel", "arbitrary")),
    )(*args)

    if (Mp, Np) != (M, N):
        out = out[:M, :N]
    return out


# ---------------------------------------------------------------------------
# fused attention sub-layer (flash-style):
#   LN1(x + OutProj(MHA(Q, K, V)))   (post-norm), grid = (B, q tiles, kv tiles)
# ---------------------------------------------------------------------------

def _flash_attn_layer_kernel(x_ref, q_ref, k_ref, v_ref, wout_ref, bout_ref,
                             g_ref, beta_ref, o_ref, m_sc, l_sc, acc_sc,
                             *, nhead, eps, seq_len, tk, masked):
    ki = pl.program_id(2)

    @pl.when(ki == 0)
    def _():
        m_sc[...] = jnp.full_like(m_sc, -1e30)
        l_sc[...] = jnp.zeros_like(l_sc)
        acc_sc[...] = jnp.zeros_like(acc_sc)

    q = q_ref[0]                                   # (tq, E) bf16
    k = k_ref[0]                                   # (tk, E) bf16
    v = v_ref[0]                                   # (tk, E) bf16
    E = q.shape[-1]
    Dh = E // nhead
    scale = 1.0 / float(np.sqrt(Dh))

    if masked:
        kpos = ki * tk + jax.lax.broadcasted_iota(jnp.int32, (1, tk), 1)
        kv_valid = kpos < seq_len                  # (1, tk)

    for h in range(nhead):
        # TODO(synk): process heads in 128-lane-aligned pairs to avoid Dh<128
        # relayouts and MXU-depth underfill (v6e/v7x feedback).
        qh = q[:, h * Dh:(h + 1) * Dh]
        kh = k[:, h * Dh:(h + 1) * Dh]
        vh = v[:, h * Dh:(h + 1) * Dh]
        s = jax.lax.dot_general(qh, kh, (((1,), (1,)), ((), ())),
                                preferred_element_type=jnp.float32) * scale
        if masked:
            s = jnp.where(kv_valid, s, -1e30)
        m_prev = m_sc[h]                           # (tq, 1)
        m_new = jnp.maximum(m_prev, jnp.max(s, axis=-1, keepdims=True))
        alpha = jnp.exp(m_prev - m_new)
        p = jnp.exp(s - m_new)
        l_sc[h] = alpha * l_sc[h] + jnp.sum(p, axis=-1, keepdims=True)
        acc_sc[h] = alpha * acc_sc[h] + jnp.dot(
            p.astype(jnp.bfloat16), vh, preferred_element_type=jnp.float32)
        m_sc[h] = m_new

    @pl.when(ki == pl.num_programs(2) - 1)
    def _():
        # normalize heads, concat along lanes, then ONE full-K out-projection
        heads = [acc_sc[h] * pl.reciprocal(l_sc[h], approx=True)
                 for h in range(nhead)]
        o2 = jnp.concatenate(heads, axis=-1) if nhead > 1 else heads[0]
        proj = jnp.dot(o2.astype(jnp.bfloat16), wout_ref[...],
                       preferred_element_type=jnp.float32) + bout_ref[...]
        r = x_ref[0] + proj                        # residual (f32)
        mean = jnp.mean(r, axis=-1, keepdims=True)
        var = jnp.mean(jnp.square(r - mean), axis=-1, keepdims=True)
        yn = (r - mean) * jax.lax.rsqrt(var + eps)
        o_ref[0] = (yn * g_ref[...] + beta_ref[...]).astype(o_ref.dtype)


def pallas_attention_block(x, q, k, v, lp, nhead, *, tq, tk, seq_len, eps=1e-5):
    # x: (B, Sp, E) f32 residual stream; q/k/v: (B, Sp, E) bf16
    B, Sp, E = x.shape
    assert E % nhead == 0
    Dh = E // nhead
    masked = (Sp != seq_len)

    kern = functools.partial(_flash_attn_layer_kernel, nhead=nhead, eps=eps,
                             seq_len=seq_len, tk=tk, masked=masked)
    # TODO(synk): single-buffer the constant-index weight/LN blocks
    # (pl.Buffered(1)) to reclaim VMEM headroom on v7x.
    return pl.pallas_call(
        kern,
        out_shape=jax.ShapeDtypeStruct((B, Sp, E), jnp.float32),
        grid=(B, Sp // tq, Sp // tk),
        in_specs=[
            pl.BlockSpec((1, tq, E), lambda b, i, j: (b, i, 0)),   # residual x
            pl.BlockSpec((1, tq, E), lambda b, i, j: (b, i, 0)),   # Q tile
            pl.BlockSpec((1, tk, E), lambda b, i, j: (b, j, 0)),   # K tile
            pl.BlockSpec((1, tk, E), lambda b, i, j: (b, j, 0)),   # V tile
            pl.BlockSpec((E, E), lambda b, i, j: (0, 0)),          # w_out
            pl.BlockSpec((1, E), lambda b, i, j: (0, 0)),          # b_out
            pl.BlockSpec((1, E), lambda b, i, j: (0, 0)),          # ln1 gain
            pl.BlockSpec((1, E), lambda b, i, j: (0, 0)),          # ln1 bias
        ],
        out_specs=pl.BlockSpec((1, tq, E), lambda b, i, j: (b, i, 0)),
        scratch_shapes=[pltpu.VMEM((nhead, tq, 1), jnp.float32),   # running max
                        pltpu.VMEM((nhead, tq, 1), jnp.float32),   # running sum
                        pltpu.VMEM((nhead, tq, Dh), jnp.float32)], # acc
        compiler_params=pltpu.CompilerParams(
            dimension_semantics=("parallel", "parallel", "arbitrary")),
    )(x, q, k, v,
      lp["w_out"].astype(jnp.bfloat16), lp["b_out"].reshape(1, E).astype(jnp.float32),
      lp["ln1_g"].reshape(1, E), lp["ln1_b"].reshape(1, E))


# ---------------------------------------------------------------------------
# fused FFN sub-layer:  LN2(x + Linear2(gelu(Linear1(x))))     (post-norm)
# ---------------------------------------------------------------------------

def _ffn_layer_kernel(x_ref, w1_ref, b1_ref, w2_ref, b2_ref,
                      g_ref, beta_ref, o_ref, *, eps):
    x = x_ref[...]                                             # (tm, E) f32
    h = jnp.dot(x.astype(jnp.bfloat16), w1_ref[...],
                preferred_element_type=jnp.float32) + b1_ref[...]
    # TODO(synk): PyTorch F.gelu uses exact erf; tanh approximation used.
    h = jax.nn.gelu(h, approximate=True)
    y = jnp.dot(h.astype(jnp.bfloat16), w2_ref[...],
                preferred_element_type=jnp.float32) + b2_ref[...]
    r = x + y
    mean = jnp.mean(r, axis=-1, keepdims=True)
    var = jnp.mean(jnp.square(r - mean), axis=-1, keepdims=True)
    out = (r - mean) * jax.lax.rsqrt(var + eps)
    o_ref[...] = (out * g_ref[...] + beta_ref[...]).astype(o_ref.dtype)


def pallas_ffn_block(x, lp, eps=1e-5, max_tm=512):
    B, S, E = x.shape
    nhid = lp["w1"].shape[1]
    M = B * S
    x2 = x.reshape(M, E)
    tm, Mp = _tile(M, max_tm, 8)
    if Mp != M:
        x2 = jnp.pad(x2, ((0, Mp - M), (0, 0)))

    out = pl.pallas_call(
        functools.partial(_ffn_layer_kernel, eps=eps),
        out_shape=jax.ShapeDtypeStruct((Mp, E), jnp.float32),
        grid=(Mp // tm,),
        in_specs=[
            pl.BlockSpec((tm, E), lambda i: (i, 0)),
            pl.BlockSpec((E, nhid), lambda i: (0, 0)),
            pl.BlockSpec((1, nhid), lambda i: (0, 0)),
            pl.BlockSpec((nhid, E), lambda i: (0, 0)),
            pl.BlockSpec((1, E), lambda i: (0, 0)),
            pl.BlockSpec((1, E), lambda i: (0, 0)),
            pl.BlockSpec((1, E), lambda i: (0, 0)),
        ],
        out_specs=pl.BlockSpec((tm, E), lambda i: (i, 0)),
        compiler_params=pltpu.CompilerParams(dimension_semantics=("parallel",)),
    )(x2,
      lp["w1"].astype(jnp.bfloat16), lp["b1"].reshape(1, nhid),
      lp["w2"].astype(jnp.bfloat16), lp["b2"].reshape(1, E),
      lp["ln2_g"].reshape(1, E), lp["ln2_b"].reshape(1, E))

    if Mp != M:
        out = out[:M]
    return out.reshape(B, S, E)


# ---------------------------------------------------------------------------
# one full transformer encoder layer (QKV proj -> flash MHA+LN -> FFN+LN)
# ---------------------------------------------------------------------------

def transformer_layer(x, lp, nhead, eps=1e-5):
    B, S, E = x.shape
    # QKV projection as one bf16-output matmul (qkv stays bf16 end-to-end)
    qkv = pallas_linear(x.reshape(B * S, E), lp["w_qkv"], lp["b_qkv"],
                        out_dtype=jnp.bfloat16).reshape(B, S, 3 * E)
    q, k, v = qkv[..., :E], qkv[..., E:2 * E], qkv[..., 2 * E:]

    t = S if S <= 512 else 512                    # q/kv tile size
    Sp = _round_up(S, t)
    xr = x
    if Sp != S:
        pad = ((0, 0), (0, Sp - S), (0, 0))
        xr = jnp.pad(xr, pad)
        q, k, v = jnp.pad(q, pad), jnp.pad(k, pad), jnp.pad(v, pad)

    attn = pallas_attention_block(xr, q, k, v, lp, nhead,
                                  tq=t, tk=t, seq_len=S, eps=eps)
    if Sp != S:
        attn = attn[:, :S]
    return pallas_ffn_block(attn, lp, eps=eps)


# ---------------------------------------------------------------------------
# additive prediction:  h[n,b,o] = sum_k onehot[b,k,n] * W[b,k,o] + bias[b,o]
# computed in (B, n_out, Nt) layout so Nt is lane-dense.
# ---------------------------------------------------------------------------

def _additive_predict_kernel(w_ref, x_ref, b_ref, o_ref):
    h = jnp.dot(w_ref[0], x_ref[0], preferred_element_type=jnp.float32)
    o_ref[0] = (h + b_ref[0]).astype(o_ref.dtype)


def pallas_additive_predict(wT, xT, biases, max_tn=512):
    # wT: (B, O, K) bf16   xT: (B, K, Nt) bf16   biases: (B, O) f32
    # TODO(synk): exploit one-hot sparsity (gather F weight rows per test row
    # via scalar-prefetched bin indices) instead of a dense K=F*n_bins matmul.
    B, O, K = wT.shape
    Nt = xT.shape[-1]
    tn, Ntp = _tile(Nt, max_tn, 128)
    if Ntp != Nt:
        xT = jnp.pad(xT, ((0, 0), (0, 0), (0, Ntp - Nt)))

    out = pl.pallas_call(
        _additive_predict_kernel,
        out_shape=jax.ShapeDtypeStruct((B, O, Ntp), jnp.float32),
        grid=(B, Ntp // tn),
        in_specs=[
            pl.BlockSpec((1, O, K), lambda b, n: (b, 0, 0)),
            pl.BlockSpec((1, K, tn), lambda b, n: (b, 0, n)),
            pl.BlockSpec((1, O, 1), lambda b, n: (b, 0, 0)),
        ],
        out_specs=pl.BlockSpec((1, O, tn), lambda b, n: (b, 0, n)),
        compiler_params=pltpu.CompilerParams(
            dimension_semantics=("parallel", "parallel")),
    )(wT, xT, biases.reshape(B, O, 1).astype(jnp.float32))

    if Ntp != Nt:
        out = out[:, :, :Nt]
    return out


# ---------------------------------------------------------------------------
# Parameter construction (deterministic, synthetic; shapes follow __init__)
# ---------------------------------------------------------------------------

def _dense_init(key, fan_in, fan_out, dtype=jnp.float32):
    kw, kb = jax.random.split(key)
    bound = 1.0 / float(np.sqrt(fan_in))
    w = jax.random.uniform(kw, (fan_in, fan_out), jnp.float32, -bound, bound)
    b = jax.random.uniform(kb, (fan_out,), jnp.float32, -bound, bound)
    return w.astype(dtype), b


def init_params(key, cfg):
    F, n_bins, E = cfg["n_features"], cfg["n_bins"], cfg["emsize"]
    nhid, nlayers, n_out = cfg["nhid"], cfg["nlayers"], cfg["n_out"]
    dec_hidden = cfg["decoder_hidden_size"]
    bf16 = jnp.bfloat16

    keys = jax.random.split(key, 4 + nlayers)
    params = {}
    # encoder: nn.Sequential(Flatten(-2,-1), Linear(F*n_bins -> E))
    params["enc_w"], params["enc_b"] = _dense_init(keys[0], F * n_bins, E, bf16)
    # y_encoder: Linear(1 -> E) kept f32 (applied as a VPU outer product)
    params["y_w"], params["y_b"] = _dense_init(keys[1], 1, E)

    # transformer encoder layers (TransformerEncoderDiffInit: distinct init/layer)
    # NOTE: tabpfn_zero_weights=True would zero out_proj / linear2 at init; random
    # values are kept so the kernels perform non-trivial work.
    layers = []
    for l in range(nlayers):
        ks = jax.random.split(keys[2 + l], 4)
        w_qkv, b_qkv = _dense_init(ks[0], E, 3 * E, bf16)
        w_out, b_out = _dense_init(ks[1], E, E, bf16)
        w1, b1 = _dense_init(ks[2], E, nhid, bf16)
        w2, b2 = _dense_init(ks[3], nhid, E, bf16)
        layers.append(dict(
            w_qkv=w_qkv, b_qkv=b_qkv, w_out=w_out, b_out=b_out,
            w1=w1, b1=b1, w2=w2, b2=b2,
            ln1_g=jnp.ones((E,), jnp.float32), ln1_b=jnp.zeros((E,), jnp.float32),
            ln2_g=jnp.ones((E,), jnp.float32), ln2_b=jnp.zeros((E,), jnp.float32)))
    params["layers"] = layers

    # AdditiveModelDecoder MLP: Linear(E->H) -> ReLU -> Linear(H -> F*n_bins*n_out + n_out)
    # TODO(synk): store dec_w2 quantized (fp8 on v7x / int8 elsewhere) and
    # dequantize in the last K step to halve the dominant HBM stream.
    out_size = F * n_bins * n_out + n_out
    params["dec_w1"], params["dec_b1"] = _dense_init(keys[2 + nlayers], E, dec_hidden, bf16)
    params["dec_w2"], params["dec_b2"] = _dense_init(keys[3 + nlayers], dec_hidden, out_size, bf16)
    return params


# ---------------------------------------------------------------------------
# Forward pass (glue in plain JAX, compute in Pallas kernels)
# ---------------------------------------------------------------------------

def mothernet_additive_forward(params, src, single_eval_pos, cfg):
    assert isinstance(src, tuple), "inputs (src) must be a (style, x, y) tuple"
    _, x_src_org, y_src_org = src
    S, B, F = x_src_org.shape
    nb, E, n_out, H = cfg["n_bins"], cfg["emsize"], cfg["n_out"], cfg["nhead"]
    sep = int(single_eval_pos)

    # --- quantile binning ------------------------------------------------
    # TODO(synk): nan_bin / sklearn_binning / constant-feature special cases of
    # the reference bin_data are not reproduced.
    train = x_src_org[:sep]
    q = jnp.arange(1, nb, dtype=jnp.float32) / nb
    edges = jnp.quantile(train, q, axis=0)                       # (nb-1, B, F)
    bins = jnp.sum(x_src_org[:, None] > edges[None], axis=1).astype(jnp.int32)
    bins_bm = bins.transpose(1, 0, 2)                            # (B, S, F)

    # --- encoder + fused y-encoder, training slice only ------------------
    # (x_src[sep:] is never used by the reference forward.)
    # TODO(synk): replace the dense one-hot contraction with a per-feature
    # weight-row gather (scalar-prefetched bin indices) to cut HBM/FLOPs n_bins x.
    x_enc = jax.nn.one_hot(bins_bm[:, :sep], nb,
                           dtype=jnp.bfloat16).reshape(B * sep, F * nb)
    y_tr = y_src_org.reshape(S, B)[:sep].astype(jnp.float32)     # (sep, B)
    y_flat = y_tr.T.reshape(B * sep, 1)
    enc = pallas_linear(x_enc, params["enc_w"], params["enc_b"],
                        y=y_flat, y_w=params["y_w"], y_b=params["y_b"])
    out = enc.reshape(B, sep, E)                                 # batch-major f32

    # --- transformer encoder (post-norm, gelu, dropout=0) -----------------
    for lp in params["layers"]:
        out = transformer_layer(out, lp, H)

    # --- AdditiveModelDecoder (decoder_type=None): mean summary + MLP ----
    # TODO(synk): 'output_attention' / 'special_token' / 'class_average'
    # summary variants of the reference decoder are not implemented.
    summary = jnp.mean(out, axis=1)                              # (B, E)
    hidden = pallas_linear(summary, params["dec_w1"], params["dec_b1"],
                           activation="relu", out_dtype=jnp.bfloat16)
    # weight-streaming matmul: full-K / wide-N tiles so blocks are multi-MiB
    res = pallas_linear(hidden, params["dec_w2"], params["dec_b2"],
                        out_dtype=jnp.bfloat16, max_tn=2048, max_tk=2048)
    K = F * nb
    weights = res[:, :K * n_out].reshape(B, K, n_out)            # bf16
    biases = res[:, K * n_out:].astype(jnp.float32)              # (B, n_out)

    # --- h = einsum('nbkd,bkdo->nbo', X_onehot[sep:], weights) + biases ---
    Nt = S - sep
    if Nt == 0:
        return jnp.zeros((0, B, n_out), jnp.float32)
    bins_test = bins_bm[:, sep:].transpose(0, 2, 1)              # (B, F, Nt)
    xt = (bins_test[:, :, None, :] ==
          jnp.arange(nb, dtype=jnp.int32)[None, None, :, None])
    xt = xt.astype(jnp.bfloat16).reshape(B, K, Nt)               # (B, K, Nt)
    wT = weights.transpose(0, 2, 1).astype(jnp.bfloat16)         # (B, n_out, K)
    h_T = pallas_additive_predict(wT, xt, biases)                # (B, n_out, Nt)
    return h_T.transpose(2, 0, 1)                                # (Nt, B, n_out)


# ---------------------------------------------------------------------------
# Demo
# ---------------------------------------------------------------------------

if __name__ == "__main__":
    cfg = dict(n_features=4, n_bins=8, emsize=32, nhead=2, nhid_factor=2,
               nlayers=2, n_out=3, decoder_hidden_size=64)
    cfg["nhid"] = cfg["emsize"] * cfg["nhid_factor"]
    S, B = 8, 2
    single_eval_pos = 6

    key = jax.random.PRNGKey(0)
    kx, ky, kp = jax.random.split(key, 3)
    x = jax.random.normal(kx, (S, B, cfg["n_features"]), jnp.float32)
    y = jax.random.randint(ky, (S, B), 0, cfg["n_out"]).astype(jnp.float32)

    params = init_params(kp, cfg)
    h = mothernet_additive_forward(params, (None, x, y), single_eval_pos, cfg)
    h = jax.block_until_ready(h)

    assert h.shape == (S - single_eval_pos, B, cfg["n_out"]), h.shape
    assert not bool(jnp.isnan(h).any()), "NaNs in output"
    print("KERNEL_OK")
</pallas_src>

<mosaic_0001>
module attributes {stable_mosaic.version = 11 : i64} {
  func.func @_linear_kernel(%arg0: i32, %arg1: i32, %arg2: i32, %arg3: memref<12x32xbf16, #tpu.memory_space<vmem>>, %arg4: memref<32x32xbf16, #tpu.memory_space<vmem>>, %arg5: memref<1x32xf32, #tpu.memory_space<vmem>>, %arg6: memref<12x1xf32, #tpu.memory_space<vmem>>, %arg7: memref<1x32xf32, #tpu.memory_space<vmem>>, %arg8: memref<1x32xf32, #tpu.memory_space<vmem>>, %arg9: memref<12x32xf32, #tpu.memory_space<vmem>>, %arg10: memref<12x32xf32, #tpu.memory_space<vmem>>) attributes {dimension_semantics = [#tpu.dimension_semantics<parallel>, #tpu.dimension_semantics<parallel>, #tpu.dimension_semantics<arbitrary>], iteration_bounds = array<i64: 1, 1, 1>, scalar_prefetch = 0 : i64, scratch_operands = 1 : i64, tpu.core_type = #tpu.core_type<tc>, window_params = [{transform_indices = @transform_0, window_bounds = array<i64: 12, 32>}, {transform_indices = @transform_1, window_bounds = array<i64: 32, 32>}, {transform_indices = @transform_2, window_bounds = array<i64: 1, 32>}, {transform_indices = @transform_3, window_bounds = array<i64: 12, 1>}, {transform_indices = @transform_4, window_bounds = array<i64: 1, 32>}, {transform_indices = @transform_5, window_bounds = array<i64: 1, 32>}, {transform_indices = @transform_6, window_bounds = array<i64: 12, 32>}]} {
    %c0_i32 = arith.constant 0 : i32
    %0 = arith.cmpi eq, %arg2, %c0_i32 : i32
    %1 = arith.extui %0 : i1 to i32
    %c0_i32_0 = arith.constant 0 : i32
    %2 = arith.cmpi ne, %1, %c0_i32_0 : i32
    scf.if %2 {
      %cst_10 = arith.constant 0.000000e+00 : f32
      %12 = vector.broadcast %cst_10 : f32 to vector<12x32xf32>
      %c0_11 = arith.constant 0 : index
      %c0_12 = arith.constant 0 : index
      %13 = vector.load %arg10[%c0_11, %c0_12] : memref<12x32xf32, #tpu.memory_space<vmem>>, vector<12x32xf32>
      tpu.vector_store %arg10[%c0_11, %c0_12], %12 {strides = array<i32>} : memref<12x32xf32, #tpu.memory_space<vmem>>, vector<12x32xf32>,
    } else {
    }
    %c0 = arith.constant 0 : index
    %c0_1 = arith.constant 0 : index
    %3 = vector.load %arg10[%c0, %c0_1] : memref<12x32xf32, #tpu.memory_space<vmem>>, vector<12x32xf32>
    %c0_2 = arith.constant 0 : index
    %c0_3 = arith.constant 0 : index
    %4 = vector.load %arg3[%c0_2, %c0_3] : memref<12x32xbf16, #tpu.memory_space<vmem>>, vector<12x32xbf16>
    %c0_4 = arith.constant 0 : index
    %c0_5 = arith.constant 0 : index
    %5 = vector.load %arg4[%c0_4, %c0_5] : memref<32x32xbf16, #tpu.memory_space<vmem>>, vector<32x32xbf16>
    %cst = arith.constant dense<0.000000e+00> : vector<12x32xf32>
    %6 = tpu.matmul %4, %5, %cst {dimension_numbers = #tpu.dot_dimension_numbers<[1], [0], [0], [1], [0, 0, 1, 1], [], []>} : vector<12x32xbf16>, vector<32x32xbf16>, vector<12x32xf32> -> vector<12x32xf32>
    %7 = arith.addf %3, %6 : vector<12x32xf32>
    %c0_6 = arith.constant 0 : index
    %c0_7 = arith.constant 0 : index
    %8 = vector.load %arg10[%c0_6, %c0_7] : memref<12x32xf32, #tpu.memory_space<vmem>>, vector<12x32xf32>
    tpu.vector_store %arg10[%c0_6, %c0_7], %7 {strides = array<i32>} : memref<12x32xf32, #tpu.memory_space<vmem>>, vector<12x32xf32>,
    %c0_i32_8 = arith.constant 0 : i32
    %9 = arith.cmpi eq, %arg2, %c0_i32_8 : i32
    %10 = arith.extui %9 : i1 to i32
    %c0_i32_9 = arith.constant 0 : i32
    %11 = arith.cmpi ne, %10, %c0_i32_9 : i32
    scf.if %11 {
      %c0_10 = arith.constant 0 : index
      %c0_11 = arith.constant 0 : index
      %12 = vector.load %arg10[%c0_10, %c0_11] : memref<12x32xf32, #tpu.memory_space<vmem>>, vector<12x32xf32>
      %c0_12 = arith.constant 0 : index
      %c0_13 = arith.constant 0 : index
      %13 = vector.load %arg5[%c0_12, %c0_13] : memref<1x32xf32, #tpu.memory_space<vmem>>, vector<1x32xf32>
      %14 = vector.broadcast %13 : vector<1x32xf32> to vector<12x32xf32>
      %15 = arith.addf %12, %14 : vector<12x32xf32>
      %c0_14 = arith.constant 0 : index
      %c0_15 = arith.constant 0 : index
      %16 = vector.load %arg6[%c0_14, %c0_15] : memref<12x1xf32, #tpu.memory_space<vmem>>, vector<12x1xf32>
      %c0_16 = arith.constant 0 : index
      %c0_17 = arith.constant 0 : index
      %17 = vector.load %arg7[%c0_16, %c0_17] : memref<1x32xf32, #tpu.memory_space<vmem>>, vector<1x32xf32>
      %18 = vector.broadcast %16 : vector<12x1xf32> to vector<12x32xf32>
      %19 = vector.broadcast %17 : vector<1x32xf32> to vector<12x32xf32>
      %20 = arith.mulf %18, %19 : vector<12x32xf32>
      %21 = arith.addf %15, %20 : vector<12x32xf32>
      %c0_18 = arith.constant 0 : index
      %c0_19 = arith.constant 0 : index
      %22 = vector.load %arg8[%c0_18, %c0_19] : memref<1x32xf32, #tpu.memory_space<vmem>>, vector<1x32xf32>
      %23 = vector.broadcast %22 : vector<1x32xf32> to vector<12x32xf32>
      %24 = arith.addf %21, %23 : vector<12x32xf32>
      %c0_20 = arith.constant 0 : index
      %c0_21 = arith.constant 0 : index
      %25 = vector.load %arg9[%c0_20, %c0_21] : memref<12x32xf32, #tpu.memory_space<vmem>>, vector<12x32xf32>
      tpu.vector_store %arg9[%c0_20, %c0_21], %24 {strides = array<i32>} : memref<12x32xf32, #tpu.memory_space<vmem>>, vector<12x32xf32>,
    } else {
    }
    return
  }
  func.func @transform_0(%arg0: i32, %arg1: i32, %arg2: i32) -> (i32, i32) {
    %c0_i32 = arith.constant 0 : i32
    return %arg0, %arg2 : i32, i32
  }
  func.func @transform_1(%arg0: i32, %arg1: i32, %arg2: i32) -> (i32, i32) {
    %c0_i32 = arith.constant 0 : i32
    return %arg2, %arg1 : i32, i32
  }
  func.func @transform_2(%arg0: i32, %arg1: i32, %arg2: i32) -> (i32, i32) {
    %c0_i32 = arith.constant 0 : i32
    %c0_i32_0 = arith.constant 0 : i32
    return %c0_i32, %arg1 : i32, i32
  }
  func.func @transform_3(%arg0: i32, %arg1: i32, %arg2: i32) -> (i32, i32) {
    %c0_i32 = arith.constant 0 : i32
    %c0_i32_0 = arith.constant 0 : i32
    return %arg0, %c0_i32 : i32, i32
  }
  func.func @transform_4(%arg0: i32, %arg1: i32, %arg2: i32) -> (i32, i32) {
    %c0_i32 = arith.constant 0 : i32
    %c0_i32_0 = arith.constant 0 : i32
    return %c0_i32, %arg1 : i32, i32
  }
  func.func @transform_5(%arg0: i32, %arg1: i32, %arg2: i32) -> (i32, i32) {
    %c0_i32 = arith.constant 0 : i32
    %c0_i32_0 = arith.constant 0 : i32
    return %c0_i32, %arg1 : i32, i32
  }
  func.func @transform_6(%arg0: i32, %arg1: i32, %arg2: i32) -> (i32, i32) {
    %c0_i32 = arith.constant 0 : i32
    return %arg0, %arg1 : i32, i32
  }
}

</mosaic_0001>

<llo_original>
// kernel: tpu_custom_call.1
$region0: #{tpu_custom_call.1}
  #allocation0 [shape = 'u32[]', space=smem, size = 0x4, offset = 0x4, fixed_abs, tag = 'smem constant byte address 0x4 - core index']
  #allocation1 [shape = 'u32[144,128]{1,0:T(1,128)}', space=vmem, size = 0x12000, scoped, tag = 'internal scratch']
  #allocation2 [shape = 'f32[12,32]{1,0:T(8,128)}', space=vmem, size = 0x2000, scoped, tag = 'scratch operand']
  %s0 = inlined_call_operand.hbm [shape: bf16[12,32], index: 0, kind: input, shape index: {}]
  %s1 = inlined_call_operand.vmem [shape: bf16[32,32], index: 1, kind: input, shape index: {}]
  %s2 = inlined_call_operand.vmem [shape: f32[1,32], index: 2, kind: input, shape index: {}]
  %s3 = inlined_call_operand.vmem [shape: f32[12,1], index: 3, kind: input, shape index: {}]
  %s4 = inlined_call_operand.vmem [shape: f32[1,32], index: 4, kind: input, shape index: {}]
  %s5 = inlined_call_operand.vmem [shape: f32[1,32], index: 5, kind: input, shape index: {}]
  %s6 = inlined_call_operand.hbm [shape: f32[12,32], index: 6, kind: output, shape index: {}]
  %s7 = sld [smem:[#allocation0]]
  $region46: #{tpu_custom_call.1} parent=0
    _
  %s9 = ssub.s32 1, %s7
  %s10 = scalar_select 0, %s9, %s7
  $region1: #{tpu_custom_call.1} parent=0
    #allocation3 [shape = 'u8[4096]{0}', space=vmem, size = 0x1000, scoped, tag = 'input window, operand 0, single buffered']
    #allocation4 [shape = 's32[1]{0}', space=sflag, size = 0x4, scoped, tag = 'scoped memory for tpu_custom_call.1']
    #allocation5 [shape = 's32[1]{0}', space=sflag, size = 0x4, scoped, tag = 'scoped memory for tpu_custom_call.1']
    #allocation6 [shape = 'u8[8192]{0}', space=vmem, size = 0x2000, scoped, tag = 'output window, operand 0, single buffered']
    %11 = vsyncpa [#allocation4], 0
    %12 = vsyncpa [#allocation5], 0
    // Predicated region
    $region2: #{tpu_custom_call.1} parent=1 // pred_check
      _
    $region3: #{tpu_custom_call.1} parent=1 // pred_check_branch
      %14 = sbr.rel (0) target = $region5
    $region4: #{tpu_custom_call.1} parent=1 // pred_region
      %s16 = ssub.s32 128, 128
      %17 = vsyncadd [#allocation4], %s16
      %s18 = sshll.u32 [#allocation3], 4
      %s19 = int_to_ptr.vmem [resolvable:$true] %s18
      %24 = dma.hbm_to_vmem [thread:$0]  %s0, 128, %s19, [#allocation4], 64, 64, 4
    $region5: #{tpu_custom_call.1} parent=1 // pred_fallthru
      _
    // Predicated region
    $region6: #{tpu_custom_call.1} parent=1 // pred_check
      _
    $region7: #{tpu_custom_call.1} parent=1 // pred_check_branch
      %26 = sbr.rel (0) target = $region9
    $region8: #{tpu_custom_call.1} parent=1 // pred_region
      _
    $region9: #{tpu_custom_call.1} parent=1 // pred_fallthru
      _
    // Predicated region
    $region10: #{tpu_custom_call.1} parent=1 // pred_check
      _
    $region11: #{tpu_custom_call.1} parent=1 // pred_check_branch
      %28 = sbr.rel (0) target = $region13
    $region12: #{tpu_custom_call.1} parent=1 // pred_region
      _
    $region13: #{tpu_custom_call.1} parent=1 // pred_fallthru
      _
    // Predicated region
    $region14: #{tpu_custom_call.1} parent=1 // pred_check
      _
    $region15: #{tpu_custom_call.1} parent=1 // pred_check_branch
      %30 = sbr.rel (0) target = $region17
    $region16: #{tpu_custom_call.1} parent=1 // pred_region
      _
    $region17: #{tpu_custom_call.1} parent=1 // pred_fallthru
      _
    // Predicated region
    $region18: #{tpu_custom_call.1} parent=1 // pred_check
      _
    $region19: #{tpu_custom_call.1} parent=1 // pred_check_branch
      %32 = sbr.rel (0) target = $region21
    $region20: #{tpu_custom_call.1} parent=1 // pred_region
      _
    $region21: #{tpu_custom_call.1} parent=1 // pred_fallthru
      _
    // Predicated region
    $region22: #{tpu_custom_call.1} parent=1 // pred_check
      _
    $region23: #{tpu_custom_call.1} parent=1 // pred_check_branch
      %34 = sbr.rel (0) target = $region25
    $region24: #{tpu_custom_call.1} parent=1 // pred_region
      _
    $region25: #{tpu_custom_call.1} parent=1 // pred_fallthru
      _
    // Predicated region
    $region26: #{tpu_custom_call.1} parent=1 // pred_check
      _
    $region27: #{tpu_custom_call.1} parent=1 // pred_check_branch
      %36 = sbr.rel (0) target = $region29
    $region28: #{tpu_custom_call.1} parent=1 // pred_region
      %37 = dma.done [#allocation4], 128
    $region29: #{tpu_custom_call.1} parent=1 // pred_fallthru
      _
    %p39 = scmp.eq.s32.totalorder 0, 0
    // Predicated region
    $region30: #{tpu_custom_call.1} parent=1 // pred_check
      %p40 = pneg %p39
    $region31: #{tpu_custom_call.1} parent=1 // pred_check_branch
      %42 = sbr.rel (%p40) target = $region33
    $region32: #{tpu_custom_call.1} parent=1 // pred_region
      %vm43 = vcmask 261120
      %44 = vst.msk [vmem:[#allocation2] sm:$0xff] %vm43, 0.0
      %vm45 = vcmask 257024
      %46 = vst.msk [vmem:[#allocation2 + $0x8] sm:$0xf] %vm45, 0.0
    $region33: #{tpu_custom_call.1} parent=1 // pred_fallthru
      _
    %v47 = vld [vmem:[#allocation2] sm:$0xff]
    %v48 = vld [vmem:[#allocation2 + $0x8] sm:$0xf]
    %v49 = vld [vmem:[#allocation3] sm:$0xf]
    %v50 = vld [vmem:[#allocation3 + $0x4] sm:$0x3]
    %v51 = vld [vmem:[%s1] sm:$0xf]
    %v52 = vld [vmem:[%s1 + $0x4] sm:$0xf]
    %v53 = vld [vmem:[%s1 + $0x8] sm:$0xf]
    %v54 = vld [vmem:[%s1 + $0xc] sm:$0xf]
    %v57 = vunpack.c.l.b16 %v49
    %v58 = vunpack.c.l.b16 %v50
    %v59 = vpack.c.b16 %v58, %v57
    %v64 = vunpack.c.l.b16 %v51
    %v65 = vunpack.c.l.b16 %v52
    %v66 = vunpack.c.l.b16 %v53
    %v67 = vunpack.c.l.b16 %v54
    %v68 = vpack.c.b16 %v65, %v64
    %v69 = vpack.c.b16 %v67, %v66
    %vm72 = vcmask 261120
    %v74 = vsel %vm72, %v59, 0
    %76 = vmatprep.subr.bf16.mxu0 0
    %77 = vmatpush1.bf16.msra.mxu0 0
    %78 = vmatprep.subr.bf16.mxu0 0
    %79 = vmatpush1.bf16.msra.mxu0 0
    %80 = vmatprep.subr.bf16.mxu0 0
    %81 = vmatpush1.bf16.msra.mxu0 0
    %82 = vmatprep.subr.bf16.mxu0 0
    %83 = vmatpush1.bf16.msra.mxu0 0
    %84 = vmatprep.subr.bf16.mxu0 0
    %85 = vmatpush1.bf16.msra.mxu0 0
    %86 = vmatprep.subr.bf16.mxu0 0
    %87 = vmatpush1.bf16.msra.mxu0 0
    %88 = vmatprep.subr.bf16.mxu0 0
    %89 = vmatpush1.bf16.msra.mxu0 %v69
    %90 = vmatprep.subr.bf16.mxu0 0
    %91 = vmatpush1.bf16.msra.mxu0 %v68
    %92 = vmatprep.subr.bf16.mxu0 0
    %93 = vmatpush2.bf16.msra.mxu0 0
    %94 = vmatprep.subr.bf16.mxu0 0
    %95 = vmatpush2.bf16.msra.mxu0 0
    %96 = vmatprep.subr.bf16.mxu0 0
    %97 = vmatpush2.bf16.msra.mxu0 0
    %98 = vmatprep.subr.bf16.mxu0 0
    %99 = vmatpush2.bf16.msra.mxu0 0
    %100 = vmatprep.subr.bf16.mxu0 0
    %101 = vmatpush2.bf16.msra.mxu0 0
    %102 = vmatprep.subr.bf16.mxu0 0
    %103 = vmatpush2.bf16.msra.mxu0 0
    %104 = vmatprep.subr.bf16.mxu0 0
    %105 = vmatpush2.bf16.msra.mxu0 0
    %106 = vmatprep.subr.bf16.mxu0 0
    %107 = vmatpush2.bf16.msra.mxu0 0
    %108 = vmatprep.mubr.bf16.mxu0 0
    %109 = vmatmul.mubr.bf16.gmra.mxu0 %v74
    %v110 = vpop.f32.mrf.mxu0
    %v111 = vadd.f32 0.0, %v110
    %v112 = vpop.f32.mrf.mxu0
    %v113 = vpop.f32.mrf.mxu0
    %v114 = vadd.f32 0.0, %v113
    %v115 = vpop.f32.mrf.mxu0
    %116 = vdwg.mxu0
    %v117 = vadd.f32 %v47, %v111
    %v118 = vadd.f32 %v48, %v114
    %119 = vst.msk [vmem:[#allocation2] sm:$0xff] %vm72, %v117
    %vm120 = vcmask 257024
    %121 = vst.msk [vmem:[#allocation2 + $0x8] sm:$0xf] %vm120, %v118
    // Predicated region
    $region34: #{tpu_custom_call.1} parent=1 // pred_check
      %p122 = pneg %p39
    $region35: #{tpu_custom_call.1} parent=1 // pred_check_branch
      %124 = sbr.rel (%p122) target = $region37
    $region36: #{tpu_custom_call.1} parent=1 // pred_region
      %v125 = vld [vmem:[#allocation2] sm:$0xff]
      %v126 = vld [vmem:[#allocation2 + $0x8] sm:$0xf]
      %v127 = vld [vmem:[%s2] sm:$0x1]
      %v129 = vlaneseq
      %v130 = vshrl.u32 %v129, 7
      %v131 = vsub.s32 0, %v130
      %v132 = vrot.slane %v127, %v131
      %v134 = vadd.f32 %v125, %v132
      %v135 = vadd.f32 %v126, %v132
      %v136 = vld [vmem:[%s3] sm:$0xff]
      %v137 = vld [vmem:[%s3 + $0x8] sm:$0xf]
      %v138 = vld [vmem:[%s4] sm:$0x1]
      %140 = vset.pattern.permute.xlu0 0
      %141 = vperm.xlu0 %140, %v136
      %v142 = vpop.permute.xlu0 %141
      %145 = vset.pattern.permute.xlu0 0
      %146 = vperm.xlu0 %145, %v137
      %v147 = vpop.permute.xlu0 %146
      %v150 = vlaneseq
      %v151 = vshrl.u32 %v150, 7
      %v152 = vsub.s32 0, %v151
      %v153 = vrot.slane %v138, %v152
      %v155 = vmul.f32 %v142, %v153
      %v156 = vmul.f32 %v147, %v153
      %v157 = vadd.f32 %v134, %v155
      %v158 = vadd.f32 %v135, %v156
      %v159 = vld [vmem:[%s5] sm:$0x1]
      %v161 = vlaneseq
      %v162 = vshrl.u32 %v161, 7
      %v163 = vsub.s32 0, %v162
      %v164 = vrot.slane %v159, %v163
      %v166 = vadd.f32 %v157, %v164
      %v167 = vadd.f32 %v158, %v164
      %168 = vst.msk [vmem:[#allocation6] sm:$0xff] %vm72, %v166
      %169 = vst.msk [vmem:[#allocation6 + $0x8] sm:$0xf] %vm120, %v167
    $region37: #{tpu_custom_call.1} parent=1 // pred_fallthru
      _
    // Predicated region
    $region38: #{tpu_custom_call.1} parent=1 // pred_check
      _
    $region39: #{tpu_custom_call.1} parent=1 // pred_check_branch
      %171 = sbr.rel (0) target = $region41
    $region40: #{tpu_custom_call.1} parent=1 // pred_region
      %s173 = ssub.s32 256, 256
      %174 = vsyncadd [#allocation5], %s173
      %s175 = sshll.u32 [#allocation6], 4
      %s176 = int_to_ptr.vmem [resolvable:$true] %s175
      %181 = dma.vmem_to_hbm [thread:$0]  %s176, 256, %s6, [#allocation5], 128, 128, 8
    $region41: #{tpu_custom_call.1} parent=1 // pred_fallthru
      _
    // Predicated region
    $region42: #{tpu_custom_call.1} parent=1 // pred_check
      _
    $region43: #{tpu_custom_call.1} parent=1 // pred_check_branch
      %183 = sbr.rel (0) target = $region45
    $region44: #{tpu_custom_call.1} parent=1 // pred_region
      %184 = dma.done [#allocation5], 256
    $region45: #{tpu_custom_call.1} parent=1 // pred_fallthru
      _
    %185 = vsyncpa [#allocation4], 1
    %186 = vsyncpa [#allocation5], 1

</llo_original>
